<compile_context>
chip_gen: v7x
topology: tpu7x:2x2x1
jax: 0.10.0
libtpu: 0.0.40
codegen_flags: <defaults>
</compile_context>

<pallas_src>
import functools

import jax
import jax.numpy as jnp
from jax.experimental import pallas as pl
from jax.experimental.pallas import tpu as pltpu


def _round_up(x, m):
    return ((x + m - 1) // m) * m


# ----------------------------------------------------------------------------
# 1. Squeeze-and-Excitation gate (per-MBConv-block building piece)
# ----------------------------------------------------------------------------
def se_kernel(x_ref, w1t_ref, b1_ref, w2t_ref, b2_ref, o_ref, *, inv_hw):
    # x_ref  : (TN, Cp, HWp)  input tile (input dtype; zero-padded)
    # w1t_ref: (Cp, RDp)      conv_reduce weight, pre-transposed (f32)
    # b1_ref : (1, RDp)
    # w2t_ref: (RDp, Cp)      conv_expand weight, pre-transposed (f32)
    # b2_ref : (1, Cp)
    # o_ref  : (TN, Cp, HWp)
    x = x_ref[...]

    # Squeeze: global average pool over the (zero-padded) spatial lane axis.
    # Padded lanes are zero, so dividing by the true HW is exact.
    pooled = jnp.sum(x.astype(jnp.float32), axis=-1) * inv_hw          # (TN, Cp)

    # conv_reduce (1x1 conv == small MXU matmul) + bias, then SiLU.
    se = jnp.dot(pooled, w1t_ref[...],
                 preferred_element_type=jnp.float32) + b1_ref[...]     # (TN, RDp)
    se = se * jax.nn.sigmoid(se)

    # conv_expand + bias, then sigmoid gate.
    se = jnp.dot(se, w2t_ref[...],
                 preferred_element_type=jnp.float32) + b2_ref[...]     # (TN, Cp)
    gate = jax.nn.sigmoid(se)

    # Excite: broadcast the gate over the spatial (lane) axis.  Multiply in
    # the input dtype (no full-tile f32 temporary for bf16 inputs).
    o_ref[...] = (x * gate.astype(x.dtype)[:, :, None]).astype(o_ref.dtype)


def _choose_tn(n, sample_bytes):
    # ~2 MiB blocks amortize the ~0.35 us/step pipeline overhead; cap so the
    # batch grid keeps at least 2 steps (v7x megacore) and never exceeds N.
    target_block_bytes = 2 * 1024 * 1024
    tn = max(1, target_block_bytes // max(1, sample_bytes))
    if n >= 2:
        tn = min(tn, n // 2)
    return int(max(1, min(tn, n)))


def squeeze_excite(x, w1, b1, w2, b2):
    """Fused SE gate.

    x : (N, C, H, W), float32 or bfloat16 (NCHW, as in the PyTorch module).
    w1: (RD, C), b1: (RD,)   -- conv_reduce (1x1) weight / bias.
    w2: (C, RD), b2: (C,)    -- conv_expand (1x1) weight / bias.
    Returns x * sigmoid(conv_expand(silu(conv_reduce(mean_hw(x))))),
    same shape and dtype as x.
    """
    N, C, H, W = x.shape
    RD = w1.shape[0]
    HW = H * W

    Cp = _round_up(C, 8)           # sublane-friendly channel count
    RDp = _round_up(RD, 8)
    HWp = _round_up(HW, 128)       # lane-dense (unmasked) loads/stores

    itemsize = jnp.dtype(x.dtype).itemsize
    TN = _choose_tn(N, Cp * HWp * itemsize)
    Np = _round_up(N, TN)
    grid = (pl.cdiv(Np, TN),)

    # Wrapper-side layout plumbing.  Zero padding preserves semantics: padded
    # channels/pixels contribute 0 to the pool and are sliced off afterwards.
    x_p = jnp.pad(x.reshape(N, C, HW), ((0, Np - N), (0, Cp - C), (0, HWp - HW)))
    w1t = jnp.pad(w1.astype(jnp.float32).T, ((0, Cp - C), (0, RDp - RD)))
    b1p = jnp.pad(b1.astype(jnp.float32).reshape(1, RD), ((0, 0), (0, RDp - RD)))
    w2t = jnp.pad(w2.astype(jnp.float32).T, ((0, RDp - RD), (0, Cp - C)))
    b2p = jnp.pad(b2.astype(jnp.float32).reshape(1, C), ((0, 0), (0, Cp - C)))

    kernel = functools.partial(se_kernel, inv_hw=1.0 / float(HW))

    out = pl.pallas_call(
        kernel,
        out_shape=jax.ShapeDtypeStruct((Np, Cp, HWp), x.dtype),
        grid_spec=pltpu.PrefetchScalarGridSpec(
            num_scalar_prefetch=0,
            grid=grid,
            in_specs=[
                pl.BlockSpec((TN, Cp, HWp), lambda n: (n, 0, 0)),
                pl.BlockSpec((Cp, RDp), lambda n: (0, 0)),
                pl.BlockSpec((1, RDp), lambda n: (0, 0)),
                pl.BlockSpec((RDp, Cp), lambda n: (0, 0)),
                pl.BlockSpec((1, Cp), lambda n: (0, 0)),
            ],
            out_specs=pl.BlockSpec((TN, Cp, HWp), lambda n: (n, 0, 0)),
        ),
        compiler_params=pltpu.CompilerParams(
            dimension_semantics=("parallel",),
            vmem_limit_bytes=32 * 1024 * 1024,
        ),
    )(x_p, w1t, b1p, w2t, b2p)

    return out[:N, :C, :HW].reshape(N, C, H, W)


# ----------------------------------------------------------------------------
# 2. Global average pool + classifier head (tail of the module's forward())
# ----------------------------------------------------------------------------
def head_kernel(x_ref, wt_ref, b_ref, feat_ref, logits_ref, *, inv_hw):
    # x_ref     : (TN, Cp, HWp) feature-map tile (input dtype; zero-padded)
    # wt_ref    : (Cp, NCLp)    classifier weight, pre-transposed (f32)
    # b_ref     : (1, NCLp)
    # feat_ref  : (TN, Cp)      pooled features
    # logits_ref: (TN, NCLp)    classifier logits
    pooled = jnp.sum(x_ref[...].astype(jnp.float32), axis=-1) * inv_hw   # (TN, Cp)
    logits = jnp.dot(pooled, wt_ref[...],
                     preferred_element_type=jnp.float32) + b_ref[...]    # (TN, NCLp)
    feat_ref[...] = pooled.astype(feat_ref.dtype)
    logits_ref[...] = logits.astype(logits_ref.dtype)


def global_pool_classifier(x, w, b):
    """features = mean_hw(x);  logits = features @ w.T + b.

    x: (N, C, H, W);  w: (num_classes, C);  b: (num_classes,).
    Returns (features (N, C), logits (N, num_classes)) in x.dtype.
    """
    N, C, H, W = x.shape
    NCL = w.shape[0]
    HW = H * W

    Cp = _round_up(C, 8)
    HWp = _round_up(HW, 128)
    NCLp = _round_up(NCL, 128)

    # 2-D per-sample outputs require the batch block to be a multiple of 8 or
    # to cover the whole (padded) batch; the head feature map is small per
    # sample, so 8-sample blocks stay comfortably inside VMEM.
    TN = N if N <= 8 else 8
    Np = _round_up(N, TN)
    grid = (Np // TN,)

    x_p = jnp.pad(x.reshape(N, C, HW), ((0, Np - N), (0, Cp - C), (0, HWp - HW)))
    wt = jnp.pad(w.astype(jnp.float32).T, ((0, Cp - C), (0, NCLp - NCL)))
    bp = jnp.pad(b.astype(jnp.float32).reshape(1, NCL), ((0, 0), (0, NCLp - NCL)))

    kernel = functools.partial(head_kernel, inv_hw=1.0 / float(HW))

    feat, logits = pl.pallas_call(
        kernel,
        out_shape=(jax.ShapeDtypeStruct((Np, Cp), x.dtype),
                   jax.ShapeDtypeStruct((Np, NCLp), x.dtype)),
        grid_spec=pltpu.PrefetchScalarGridSpec(
            num_scalar_prefetch=0,
            grid=grid,
            in_specs=[
                pl.BlockSpec((TN, Cp, HWp), lambda n: (n, 0, 0)),
                pl.BlockSpec((Cp, NCLp), lambda n: (0, 0)),
                pl.BlockSpec((1, NCLp), lambda n: (0, 0)),
            ],
            out_specs=[
                pl.BlockSpec((TN, Cp), lambda n: (n, 0)),
                pl.BlockSpec((TN, NCLp), lambda n: (n, 0)),
            ],
        ),
        compiler_params=pltpu.CompilerParams(
            dimension_semantics=("parallel",),
            vmem_limit_bytes=32 * 1024 * 1024,
        ),
    )(x_p, wt, bp)

    return feat[:N, :C], logits[:N, :NCL]


# ----------------------------------------------------------------------------
# Pure-JAX references (mirror the PyTorch forward, float32 math)
# ----------------------------------------------------------------------------
def se_reference(x, w1, b1, w2, b2):
    xf = x.astype(jnp.float32)
    x_se = jnp.mean(xf, axis=(2, 3), keepdims=True)                    # (N,C,1,1)
    x_se = jnp.einsum('nchw,rc->nrhw', x_se, w1) + b1[None, :, None, None]
    x_se = x_se * jax.nn.sigmoid(x_se)                                 # SiLU
    x_se = jnp.einsum('nrhw,cr->nchw', x_se, w2) + b2[None, :, None, None]
    return xf * jax.nn.sigmoid(x_se)


def head_reference(x, w, b):
    xf = x.astype(jnp.float32)
    feat = jnp.mean(xf, axis=(2, 3))                                    # (N,C)
    logits = feat @ w.astype(jnp.float32).T + b.astype(jnp.float32)     # (N,NCL)
    return feat, logits


if __name__ == "__main__":
    # SE block config of an EfficientNetV2 MBConv stage at SMALL shapes:
    # in_chs=4, rd_ratio=0.25 -> rd_channels = 1.  Head: num_classes=10.
    N, C, H, W = 2, 4, 16, 16
    RD = max(1, round(C * 0.25))
    NUM_CLASSES = 10

    key = jax.random.PRNGKey(0)
    kx, k1, k2, k3, k4, k5, k6 = jax.random.split(key, 7)
    x = jax.random.normal(kx, (N, C, H, W), dtype=jnp.float32)
    # conv_reduce: Conv2d(C, RD, 1, bias=True) -> weight (RD, C), bias (RD,)
    w1 = jax.random.normal(k1, (RD, C), dtype=jnp.float32) * 0.5
    b1 = jax.random.normal(k2, (RD,), dtype=jnp.float32) * 0.1
    # conv_expand: Conv2d(RD, C, 1, bias=True) -> weight (C, RD), bias (C,)
    w2 = jax.random.normal(k3, (C, RD), dtype=jnp.float32) * 0.5
    b2 = jax.random.normal(k4, (C,), dtype=jnp.float32) * 0.1
    # classifier: Linear(C, num_classes) -> weight (num_classes, C), bias (num_classes,)
    wc = jax.random.normal(k5, (NUM_CLASSES, C), dtype=jnp.float32) * 0.5
    bc = jax.random.normal(k6, (NUM_CLASSES,), dtype=jnp.float32) * 0.1

    # --- SE gate: float32 path (matches the PyTorch module's dtype) ---------
    out = jax.block_until_ready(squeeze_excite(x, w1, b1, w2, b2))
    ref = se_reference(x, w1, b1, w2, b2)
    assert out.shape == (N, C, H, W) and out.dtype == x.dtype
    assert jnp.allclose(out, ref, atol=1e-5, rtol=1e-5), "SE f32 mismatch"

    # --- SE gate: bfloat16 I/O path (halves HBM traffic) --------------------
    x_bf = x.astype(jnp.bfloat16)
    out_bf = jax.block_until_ready(squeeze_excite(x_bf, w1, b1, w2, b2))
    ref_bf = se_reference(x_bf, w1, b1, w2, b2)
    assert out_bf.dtype == jnp.bfloat16
    assert jnp.allclose(out_bf.astype(jnp.float32), ref_bf, atol=2e-2, rtol=2e-2), \
        "SE bf16 mismatch"

    # --- Global pool + classifier head (features, logits of forward()) ------
    feat, logits = jax.block_until_ready(global_pool_classifier(x, wc, bc))
    feat_ref, logits_ref = head_reference(x, wc, bc)
    assert feat.shape == (N, C) and logits.shape == (N, NUM_CLASSES)
    assert jnp.allclose(feat, feat_ref, atol=1e-5, rtol=1e-5), "features mismatch"
    assert jnp.allclose(logits, logits_ref, atol=1e-5, rtol=1e-5), "logits mismatch"

    print("KERNEL_OK")
</pallas_src>

<mosaic_0001>
module attributes {stable_mosaic.version = 11 : i64} {
  func.func @se_kernel(%arg0: i32, %arg1: memref<1x8x256xf32, #tpu.memory_space<vmem>>, %arg2: memref<8x8xf32, #tpu.memory_space<vmem>>, %arg3: memref<1x8xf32, #tpu.memory_space<vmem>>, %arg4: memref<8x8xf32, #tpu.memory_space<vmem>>, %arg5: memref<1x8xf32, #tpu.memory_space<vmem>>, %arg6: memref<1x8x256xf32, #tpu.memory_space<vmem>>) attributes {dimension_semantics = [#tpu.dimension_semantics<parallel>], iteration_bounds = array<i64: 2>, scalar_prefetch = 0 : i64, scratch_operands = 0 : i64, tpu.core_type = #tpu.core_type<tc>, window_params = [{transform_indices = @transform_0, window_bounds = array<i64: 1, 8, 256>}, {pipeline_mode = #tpu.pipeline_mode<synchronous>, transform_indices = @transform_1, window_bounds = array<i64: 8, 8>}, {pipeline_mode = #tpu.pipeline_mode<synchronous>, transform_indices = @transform_2, window_bounds = array<i64: 1, 8>}, {pipeline_mode = #tpu.pipeline_mode<synchronous>, transform_indices = @transform_3, window_bounds = array<i64: 8, 8>}, {pipeline_mode = #tpu.pipeline_mode<synchronous>, transform_indices = @transform_4, window_bounds = array<i64: 1, 8>}, {transform_indices = @transform_5, window_bounds = array<i64: 1, 8, 256>}]} {
    %c0 = arith.constant 0 : index
    %c0_0 = arith.constant 0 : index
    %c0_1 = arith.constant 0 : index
    %0 = vector.load %arg1[%c0, %c0_0, %c0_1] : memref<1x8x256xf32, #tpu.memory_space<vmem>>, vector<1x8x256xf32>
    %cst = arith.constant dense<0.000000e+00> : vector<1x8xf32>
    %1 = vector.multi_reduction <add>, %0, %cst [2] : vector<1x8x256xf32> to vector<1x8xf32>
    %cst_2 = arith.constant 3.906250e-03 : f32
    %2 = vector.broadcast %cst_2 : f32 to vector<1x8xf32>
    %3 = arith.mulf %1, %2 : vector<1x8xf32>
    %c0_3 = arith.constant 0 : index
    %c0_4 = arith.constant 0 : index
    %4 = vector.load %arg2[%c0_3, %c0_4] : memref<8x8xf32, #tpu.memory_space<vmem>>, vector<8x8xf32>
    %cst_5 = arith.constant dense<0.000000e+00> : vector<1x8xf32>
    %5 = tpu.matmul %3, %4, %cst_5 {dimension_numbers = #tpu.dot_dimension_numbers<[1], [0], [0], [1], [0, 0, 1, 1], [], []>} : vector<1x8xf32>, vector<8x8xf32>, vector<1x8xf32> -> vector<1x8xf32>
    %c0_6 = arith.constant 0 : index
    %c0_7 = arith.constant 0 : index
    %6 = vector.load %arg3[%c0_6, %c0_7] : memref<1x8xf32, #tpu.memory_space<vmem>>, vector<1x8xf32>
    %7 = arith.addf %5, %6 : vector<1x8xf32>
    %8 = arith.negf %7 : vector<1x8xf32>
    %9 = math.exp %8 : vector<1x8xf32>
    %cst_8 = arith.constant 1.000000e+00 : f32
    %10 = vector.broadcast %cst_8 : f32 to vector<1x8xf32>
    %11 = arith.addf %10, %9 : vector<1x8xf32>
    %12 = arith.divf %10, %11 : vector<1x8xf32>
    %13 = arith.mulf %7, %12 : vector<1x8xf32>
    %c0_9 = arith.constant 0 : index
    %c0_10 = arith.constant 0 : index
    %14 = vector.load %arg4[%c0_9, %c0_10] : memref<8x8xf32, #tpu.memory_space<vmem>>, vector<8x8xf32>
    %cst_11 = arith.constant dense<0.000000e+00> : vector<1x8xf32>
    %15 = tpu.matmul %13, %14, %cst_11 {dimension_numbers = #tpu.dot_dimension_numbers<[1], [0], [0], [1], [0, 0, 1, 1], [], []>} : vector<1x8xf32>, vector<8x8xf32>, vector<1x8xf32> -> vector<1x8xf32>
    %c0_12 = arith.constant 0 : index
    %c0_13 = arith.constant 0 : index
    %16 = vector.load %arg5[%c0_12, %c0_13] : memref<1x8xf32, #tpu.memory_space<vmem>>, vector<1x8xf32>
    %17 = arith.addf %15, %16 : vector<1x8xf32>
    %18 = arith.negf %17 : vector<1x8xf32>
    %19 = math.exp %18 : vector<1x8xf32>
    %cst_14 = arith.constant 1.000000e+00 : f32
    %20 = vector.broadcast %cst_14 : f32 to vector<1x8xf32>
    %21 = arith.addf %20, %19 : vector<1x8xf32>
    %22 = arith.divf %20, %21 : vector<1x8xf32>
    %23 = vector.shape_cast %22 : vector<1x8xf32> to vector<1x8x1xf32>
    %24 = vector.broadcast %23 : vector<1x8x1xf32> to vector<1x8x256xf32>
    %25 = arith.mulf %0, %24 : vector<1x8x256xf32>
    %c0_15 = arith.constant 0 : index
    %c0_16 = arith.constant 0 : index
    %c0_17 = arith.constant 0 : index
    %26 = vector.load %arg6[%c0_15, %c0_16, %c0_17] : memref<1x8x256xf32, #tpu.memory_space<vmem>>, vector<1x8x256xf32>
    tpu.vector_store %arg6[%c0_15, %c0_16, %c0_17], %25 {strides = array<i32>} : memref<1x8x256xf32, #tpu.memory_space<vmem>>, vector<1x8x256xf32>,
    return
  }
  func.func @transform_0(%arg0: i32) -> (i32, i32, i32) {
    %c0_i32 = arith.constant 0 : i32
    %c0_i32_0 = arith.constant 0 : i32
    %c0_i32_1 = arith.constant 0 : i32
    return %arg0, %c0_i32, %c0_i32_0 : i32, i32, i32
  }
  func.func @transform_1(%arg0: i32) -> (i32, i32) {
    %c0_i32 = arith.constant 0 : i32
    %c0_i32_0 = arith.constant 0 : i32
    %c0_i32_1 = arith.constant 0 : i32
    return %c0_i32, %c0_i32_0 : i32, i32
  }
  func.func @transform_2(%arg0: i32) -> (i32, i32) {
    %c0_i32 = arith.constant 0 : i32
    %c0_i32_0 = arith.constant 0 : i32
    %c0_i32_1 = arith.constant 0 : i32
    return %c0_i32, %c0_i32_0 : i32, i32
  }
  func.func @transform_3(%arg0: i32) -> (i32, i32) {
    %c0_i32 = arith.constant 0 : i32
    %c0_i32_0 = arith.constant 0 : i32
    %c0_i32_1 = arith.constant 0 : i32
    return %c0_i32, %c0_i32_0 : i32, i32
  }
  func.func @transform_4(%arg0: i32) -> (i32, i32) {
    %c0_i32 = arith.constant 0 : i32
    %c0_i32_0 = arith.constant 0 : i32
    %c0_i32_1 = arith.constant 0 : i32
    return %c0_i32, %c0_i32_0 : i32, i32
  }
  func.func @transform_5(%arg0: i32) -> (i32, i32, i32) {
    %c0_i32 = arith.constant 0 : i32
    %c0_i32_0 = arith.constant 0 : i32
    %c0_i32_1 = arith.constant 0 : i32
    return %arg0, %c0_i32, %c0_i32_0 : i32, i32, i32
  }
}

</mosaic_0001>

<llo_original>
// kernel: tpu_custom_call.1
$region0: #{tpu_custom_call.1}
  #allocation0 [shape = 'u32[]', space=smem, size = 0x4, offset = 0x4, fixed_abs, tag = 'smem constant byte address 0x4 - core index']
  #allocation1 [shape = 'u32[144,128]{1,0:T(1,128)}', space=vmem, size = 0x12000, scoped, tag = 'internal scratch']
  %s0 = inlined_call_operand.hbm [shape: f32[2,8,256], index: 0, kind: input, shape index: {}]
  %s1 = inlined_call_operand.hbm [shape: f32[8,8], index: 1, kind: input, shape index: {}]
  %s2 = inlined_call_operand.vmem [shape: f32[1,8], index: 2, kind: input, shape index: {}]
  %s3 = inlined_call_operand.vmem [shape: f32[8,8], index: 3, kind: input, shape index: {}]
  %s4 = inlined_call_operand.vmem [shape: f32[1,8], index: 4, kind: input, shape index: {}]
  %s5 = inlined_call_operand.hbm [shape: f32[2,8,256], index: 5, kind: output, shape index: {}]
  %s6 = sld [smem:[#allocation0]]
  $region61: #{tpu_custom_call.1} parent=0
    _
  %s8 = ssub.s32 1, %s6
  %s9 = scalar_select 0, %s8, %s6
  $region1: #{tpu_custom_call.1} parent=0
    #allocation2 [shape = 'u8[16384]{0}', space=vmem, size = 0x4000, scoped, tag = 'input window, operand 0']
    #allocation3 [shape = 's32[2]{0}', space=sflag, size = 0x8, scoped, tag = 'scoped memory for tpu_custom_call.1']
    #allocation4 [shape = 's32[2]{0}', space=sflag, size = 0x8, scoped, tag = 'scoped memory for tpu_custom_call.1']
    #allocation5 [shape = 'u8[4096]{0}', space=vmem, size = 0x1000, scoped, tag = 'input window, operand 1, single buffered']
    #allocation6 [shape = 's32[1]{0}', space=sflag, size = 0x4, scoped, tag = 'scoped memory for tpu_custom_call.1']
    #allocation7 [shape = 'u8[16384]{0}', space=vmem, size = 0x4000, scoped, tag = 'output window, operand 0']
    %10 = vsyncpa [#allocation3], 0
    %s11 = scalar_lea.sflag [#allocation3], 1
    %12 = vsyncpa %s11, 0
    %13 = vsyncpa [#allocation6], 0
    %14 = vsyncpa [#allocation4], 0
    %s15 = scalar_lea.sflag [#allocation4], 1
    %16 = vsyncpa %s15, 0
    loop: start=0, step=1, limit=4
    $region2: #{tpu_custom_call.1} parent=1 // loop_pre_header
      _
    $region3: #{tpu_custom_call.1} parent=1 // loop_header
      %s18 = sphi 0, %s22
      %p19 = scmp.ge.s32.totalorder %s18, 4
      %s28 = sphi 0, %s30
      %s31 = sphi 0, %s28
      %s32 = sphi 0, %s31
      %s48 = sphi 0, %s32
      %s52 = sphi 0, %s52
      %s54 = sphi 0, %s52
      %s55 = sphi 0, %s54
      %s69 = sphi 0, %s55
      %s73 = sphi 0, %s73
      %s75 = sphi 0, %s73
      %s76 = sphi 0, %s75
      %s90 = sphi 0, %s76
      %s94 = sphi 0, %s94
      %s96 = sphi 0, %s94
      %s97 = sphi 0, %s96
      %s111 = sphi 0, %s97
      %s115 = sphi 0, %s115
      %s117 = sphi 0, %s115
      %s118 = sphi 0, %s117
      %s132 = sphi 0, %s118
      %s138 = sphi 0, %s140
      %s141 = sphi 0, %s138
      %s142 = sphi 0, %s141
      %s158 = sphi 0, %s142
    $region4: #{tpu_custom_call.1} parent=1 // loop_header_branch
      %21 = sbr.rel (%p19) target = $region8
    $region5: #{tpu_custom_call.1} parent=1 // loop_body
      %s23 = ssub.s32 %s18, 1
      %s24 = ssub.s32 %s18, 2
      %s25 = sadd.s32 %s18, 1
      %s26 = ssub.s32 %s18, %s25
      %p27 = scmp.eq.s32.totalorder %s26, 0
      %s29 = sadd.s32 %s28, 1
      %s30 = scalar_select %p27, %s28, %s29
      %p33 = pneg %p27
      %p34 = scmp.eq.s32.totalorder %s18, 1
      %p35 = por %p33, %p34
      %p36 = scmp.ne.s32.totalorder %s28, %s31
      %p37 = scmp.eq.s32.totalorder %s18, 0
      %p38 = por %p36, %p37
      %p39 = scmp.ne.s32.totalorder %s28, %s31
      %p40 = scmp.eq.s32.totalorder %s23, 1
      %p41 = por %p39, %p40
      %p42 = scmp.ne.s32.totalorder %s31, %s32
      %p43 = scmp.eq.s32.totalorder %s23, 0
      %p44 = por %p42, %p43
      %p45 = scmp.ne.s32.totalorder %s31, %s32
      %p46 = scmp.eq.s32.totalorder %s24, 1
      %p47 = por %p45, %p46
      %p49 = scmp.ne.s32.totalorder %s32, %s48
      %p50 = scmp.eq.s32.totalorder %s24, 0
      %p51 = por %p49, %p50
      %s53 = sadd.s32 %s52, 1
      %p56 = scmp.eq.s32.totalorder %s18, 1
      %p57 = scmp.ne.s32.totalorder %s52, %s54
      %p58 = scmp.eq.s32.totalorder %s18, 0
      %p59 = por %p57, %p58
      %p60 = scmp.ne.s32.totalorder %s52, %s54
      %p61 = scmp.eq.s32.totalorder %s23, 1
      %p62 = por %p60, %p61
      %p63 = scmp.ne.s32.totalorder %s54, %s55
      %p64 = scmp.eq.s32.totalorder %s23, 0
      %p65 = por %p63, %p64
      %p66 = scmp.ne.s32.totalorder %s54, %s55
      %p67 = scmp.eq.s32.totalorder %s24, 1
      %p68 = por %p66, %p67
      %p70 = scmp.ne.s32.totalorder %s55, %s69
      %p71 = scmp.eq.s32.totalorder %s24, 0
      %p72 = por %p70, %p71
      %s74 = sadd.s32 %s73, 1
      %p77 = scmp.eq.s32.totalorder %s18, 1
      %p78 = scmp.ne.s32.totalorder %s73, %s75
      %p79 = scmp.eq.s32.totalorder %s18, 0
      %p80 = por %p78, %p79
      %p81 = scmp.ne.s32.totalorder %s73, %s75
      %p82 = scmp.eq.s32.totalorder %s23, 1
      %p83 = por %p81, %p82
      %p84 = scmp.ne.s32.totalorder %s75, %s76
      %p85 = scmp.eq.s32.totalorder %s23, 0
      %p86 = por %p84, %p85
      %p87 = scmp.ne.s32.totalorder %s75, %s76
      %p88 = scmp.eq.s32.totalorder %s24, 1
      %p89 = por %p87, %p88
      %p91 = scmp.ne.s32.totalorder %s76, %s90
      %p92 = scmp.eq.s32.totalorder %s24, 0
      %p93 = por %p91, %p92
      %s95 = sadd.s32 %s94, 1
      %p98 = scmp.eq.s32.totalorder %s18, 1
      %p99 = scmp.ne.s32.totalorder %s94, %s96
      %p100 = scmp.eq.s32.totalorder %s18, 0
      %p101 = por %p99, %p100
      %p102 = scmp.ne.s32.totalorder %s94, %s96
      %p103 = scmp.eq.s32.totalorder %s23, 1
      %p104 = por %p102, %p103
      %p105 = scmp.ne.s32.totalorder %s96, %s97
      %p106 = scmp.eq.s32.totalorder %s23, 0
      %p107 = por %p105, %p106
      %p108 = scmp.ne.s32.totalorder %s96, %s97
      %p109 = scmp.eq.s32.totalorder %s24, 1
      %p110 = por %p108, %p109
      %p112 = scmp.ne.s32.totalorder %s97, %s111
      %p113 = scmp.eq.s32.totalorder %s24, 0
      %p114 = por %p112, %p113
      %s116 = sadd.s32 %s115, 1
      %p119 = scmp.eq.s32.totalorder %s18, 1
      %p120 = scmp.ne.s32.totalorder %s115, %s117
      %p121 = scmp.eq.s32.totalorder %s18, 0
      %p122 = por %p120, %p121
      %p123 = scmp.ne.s32.totalorder %s115, %s117
      %p124 = scmp.eq.s32.totalorder %s23, 1
      %p125 = por %p123, %p124
      %p126 = scmp.ne.s32.totalorder %s117, %s118
      %p127 = scmp.eq.s32.totalorder %s23, 0
      %p128 = por %p126, %p127
      %p129 = scmp.ne.s32.totalorder %s117, %s118
      %p130 = scmp.eq.s32.totalorder %s24, 1
      %p131 = por %p129, %p130
      %p133 = scmp.ne.s32.totalorder %s118, %s132
      %p134 = scmp.eq.s32.totalorder %s24, 0
      %p135 = por %p133, %p134
      %s136 = ssub.s32 %s18, %s25
      %p137 = scmp.eq.s32.totalorder %s136, 0
      %s139 = sadd.s32 %s138, 1
      %s140 = scalar_select %p137, %s138, %s139
      %p143 = pneg %p137
      %p144 = scmp.eq.s32.totalorder %s18, 1
      %p145 = por %p143, %p144
      %p146 = scmp.ne.s32.totalorder %s138, %s141
      %p147 = scmp.eq.s32.totalorder %s18, 0
      %p148 = por %p146, %p147
      %p149 = scmp.ne.s32.totalorder %s138, %s141
      %p150 = scmp.eq.s32.totalorder %s23, 1
      %p151 = por %p149, %p150
      %p152 = scmp.ne.s32.totalorder %s141, %s142
      %p153 = scmp.eq.s32.totalorder %s23, 0
      %p154 = por %p152, %p153
      %p155 = scmp.ne.s32.totalorder %s141, %s142
      %p156 = scmp.eq.s32.totalorder %s24, 1
      %p157 = por %p155, %p156
      %p159 = scmp.ne.s32.totalorder %s142, %s158
      %p160 = scmp.eq.s32.totalorder %s24, 0
      %p161 = por %p159, %p160
      %p162 = scmp.le.s32.totalorder 1, %s18
      %p163 = scmp.lt.s32.totalorder %s18, 3
      %p164 = pnand %p162, %p163
      %p165 = pneg %p164
      // Predicated region
      $region9: #{tpu_custom_call.1} parent=5 // pred_check
        _
      $region10: #{tpu_custom_call.1} parent=5 // pred_check_branch
        %167 = sbr.rel (%p164) target = $region12
      $region11: #{tpu_custom_call.1} parent=5 // pred_region
        %s168 = ssub.s32 %s18, 1
        // Predicated region
        $region13: #{tpu_custom_call.1} parent=11 // pred_check
          %p169 = pneg %p65
        $region14: #{tpu_custom_call.1} parent=11 // pred_check_branch
          %171 = sbr.rel (%p169) target = $region16
        $region15: #{tpu_custom_call.1} parent=11 // pred_region
          %s173 = ssub.s32 128, 128
          %174 = vsyncadd [#allocation6], %s173
          %s176 = sshll.u32 [#allocation5], 4
          %s177 = int_to_ptr.vmem [resolvable:$true] %s176
          %179 = dma.hbm_to_vmem [thread:$0]  %s1, 128, %s177, [#allocation6]
        $region16: #{tpu_custom_call.1} parent=11 // pred_fallthru
          _
        // Predicated region
        $region17: #{tpu_custom_call.1} parent=11 // pred_check
          %p180 = pneg %p86
        $region18: #{tpu_custom_call.1} parent=11 // pred_check_branch
          %182 = sbr.rel (%p180) target = $region20
        $region19: #{tpu_custom_call.1} parent=11 // pred_region
          _
        $region20: #{tpu_custom_call.1} parent=11 // pred_fallthru
          _
        // Predicated region
        $region21: #{tpu_custom_call.1} parent=11 // pred_check
          %p183 = pneg %p107
        $region22: #{tpu_custom_call.1} parent=11 // pred_check_branch
          %185 = sbr.rel (%p183) target = $region24
        $region23: #{tpu_custom_call.1} parent=11 // pred_region
          _
        $region24: #{tpu_custom_call.1} parent=11 // pred_fallthru
          _
        // Predicated region
        $region25: #{tpu_custom_call.1} parent=11 // pred_check
          %p186 = pneg %p128
        $region26: #{tpu_custom_call.1} parent=11 // pred_check_branch
          %188 = sbr.rel (%p186) target = $region28
        $region27: #{tpu_custom_call.1} parent=11 // pred_region
          _
        $region28: #{tpu_custom_call.1} parent=11 // pred_fallthru
          _
      $region12: #{tpu_custom_call.1} parent=5 // pred_fallthru
        _
      %p189 = scmp.lt.s32.totalorder %s18, 2
      // Predicated region
      $region29: #{tpu_custom_call.1} parent=5 // pred_check
        %p190 = pneg %p189
      $region30: #{tpu_custom_call.1} parent=5 // pred_check_branch
        %192 = sbr.rel (%p190) target = $region32
      $region31: #{tpu_custom_call.1} parent=5 // pred_region
        // Predicated region
        $region33: #{tpu_custom_call.1} parent=31 // pred_check
          %p193 = pneg %p38
        $region34: #{tpu_custom_call.1} parent=31 // pred_check_branch
          %195 = sbr.rel (%p193) target = $region36
        $region35: #{tpu_custom_call.1} parent=31 // pred_region
          %s196 = sand.u32 %s28, 1
          %s197 = scalar_lea.sflag [#allocation3], %s196
          %s198 = sand.u32 %s28, 1
          %s199 = smul.addr %s198, 16
          %s200 = scalar_lea.vmem [#allocation2], %s199
          %s202 = ssub.s32 256, 256
          %203 = vsyncadd %s197, %s202
          %s204 = smul.addr %s18, 2
          %s205 = smul.addr %s204, 128
          %s206 = scalar_lea.hbm %s0, %s205
          %s208 = sshll.u32 %s200, 4
          %s209 = int_to_ptr.vmem [resolvable:$true] %s208
          %211 = dma.hbm_to_vmem [thread:$0]  %s206, 256, %s209, %s197
        $region36: #{tpu_custom_call.1} parent=31 // pred_fallthru
          _
      $region32: #{tpu_custom_call.1} parent=5 // pred_fallthru
        _
      %p212 = scmp.le.s32.totalorder 1, %s18
      %p213 = scmp.lt.s32.totalorder %s18, 3
      %p214 = pnand %p212, %p213
      %p215 = pneg %p214
      // Predicated region
      $region37: #{tpu_custom_call.1} parent=5 // pred_check
        _
      $region38: #{tpu_custom_call.1} parent=5 // pred_check_branch
        %217 = sbr.rel (%p214) target = $region40
      $region39: #{tpu_custom_call.1} parent=5 // pred_region
        %s218 = ssub.s32 %s18, 1
        %s219 = sand.u32 %s31, 1
        %s220 = scalar_lea.sflag [#allocation3], %s219
        %s221 = sand.u32 %s31, 1
        %s222 = smul.addr %s221, 16
        %s223 = scalar_lea.vmem [#allocation2], %s222
        // Predicated region
        $region41: #{tpu_custom_call.1} parent=39 // pred_check
          %p224 = pneg %p44
        $region42: #{tpu_custom_call.1} parent=39 // pred_check_branch
          %226 = sbr.rel (%p224) target = $region44
        $region43: #{tpu_custom_call.1} parent=39 // pred_region
          %227 = dma.done %s220, 256
        $region44: #{tpu_custom_call.1} parent=39 // pred_fallthru
          _
        // Predicated region
        $region45: #{tpu_custom_call.1} parent=39 // pred_check
          %p228 = pneg %p65
        $region46: #{tpu_custom_call.1} parent=39 // pred_check_branch
          %230 = sbr.rel (%p228) target = $region48
        $region47: #{tpu_custom_call.1} parent=39 // pred_region
          %231 = dma.done [#allocation6], 128
        $region48: #{tpu_custom_call.1} parent=39 // pred_fallthru
          _
        %s232 = sand.u32 %s31, 1
        %s233 = scalar_lea.sflag [#allocation3], %s232
        %s234 = sand.u32 %s31, 1
        %s235 = smul.addr %s234, 16
        %s236 = scalar_lea.vmem [#allocation2], %s235
        %p237 = pneg %p44
        %p238 = pneg %p41
        %p239 = pneg %p65
        %p240 = pneg %p62
        %p241 = pneg %p86
        %p242 = pneg %p83
        %p243 = pneg %p107
        %p244 = pneg %p104
        %p245 = pneg %p128
        %p246 = pneg %p125
        %p247 = pneg %p154
        %p248 = pneg %p151
        %s249 = sand.u32 %s141, 1
        %s250 = scalar_lea.sflag [#allocation4], %s249
        %s251 = sand.u32 %s141, 1
        %s252 = smul.addr %s251, 16
        %s253 = scalar_lea.vmem [#allocation7], %s252
        %v254 = vld [vmem:[%s223] sm:$0xff]
        %v255 = vld [vmem:[%s223 + $0x8] sm:$0xff]
        %v256 = vadd.f32 %v254, %v255
        %257 = vadd.xlane.f32.xlu0 %v256
        %v258 = vpop.xlane.xlu0 %257
        %v259 = vmul.f32 %v258, 0.00390625
        %v260 = vld [vmem:[#allocation5] sm:$0xff]
        %v261 = vld [vmem:[%s2] sm:$0x1]
        %v263 = vlaneseq
        %v264 = vand.u32 %v263, 127
        %v265 = vlaneseq
        %v266 = vshrl.u32 %v265, 7
        %v267 = vsub.s32 %v264, %v266
        %v268 = vrot.slane %v259, %v267
        %vm269 = vcmask 64512
        %v270 = vsel %vm269, %v268, 0
        %272 = vmatprep.subr.mxu0 0.0
        %273 = vmatpush1.msra.mxu0 %v260
        %274 = vmatprep.subr.mxu0 0.0
        %275 = vmatpush1.msra.mxu0 0.0
        %276 = vmatprep.subr.mxu0 0.0
        %277 = vmatpush1.msra.mxu0 0.0
        %278 = vmatprep.subr.mxu0 0.0
        %279 = vmatpush1.msra.mxu0 0.0
        %280 = vmatprep.subr.mxu0 0.0
        %281 = vmatpush1.msra.mxu0 0.0
        %282 = vmatprep.subr.mxu0 0.0
        %283 = vmatpush1.msra.mxu0 0.0
        %284 = vmatprep.subr.mxu0 0.0
        %285 = vmatpush1.msra.mxu0 0.0
        %286 = vmatprep.subr.mxu0 0.0
        %287 = vmatpush1.msra.mxu0 0.0
        %288 = vmatprep.subr.mxu0 0.0
        %289 = vmatpush1.msra.mxu0 0.0
        %290 = vmatprep.subr.mxu0 0.0
        %291 = vmatpush1.msra.mxu0 0.0
        %292 = vmatprep.subr.mxu0 0.0
        %293 = vmatpush1.msra.mxu0 0.0
        %294 = vmatprep.subr.mxu0 0.0
        %295 = vmatpush1.msra.mxu0 0.0
        %296 = vmatprep.subr.mxu0 0.0
        %297 = vmatpush1.msra.mxu0 0.0
        %298 = vmatprep.subr.mxu0 0.0
        %299 = vmatpush1.msra.mxu0 0.0
        %300 = vmatprep.subr.mxu0 0.0
        %301 = vmatpush1.msra.mxu0 0.0
        %302 = vmatprep.subr.mxu0 0.0
        %303 = vmatpush1.msra.mxu0 0.0
        %304 = vmatprep.subr.mxu0 0.0
        %305 = vmatpush1.msra.mxu0 0.0
        %306 = vmatprep.subr.mxu0 0.0
        %307 = vmatpush1.msra.mxu0 0.0
        %308 = vmatprep.subr.mxu0 0.0
        %309 = vmatpush1.msra.mxu0 0.0
        %310 = vmatprep.subr.mxu0 0.0
        %311 = vmatpush1.msra.mxu0 0.0
        %312 = vmatprep.subr.mxu0 0.0
        %313 = vmatpush1.msra.mxu0 0.0
        %314 = vmatprep.subr.mxu0 0.0
        %315 = vmatpush1.msra.mxu0 0.0
        %316 = vmatprep.subr.mxu0 0.0
        %317 = vmatpush1.msra.mxu0 0.0
        %318 = vmatprep.subr.mxu0 0.0
        %319 = vmatpush1.msra.mxu0 0.0
        %320 = vmatprep.subr.mxu0 0.0
        %321 = vmatpush1.msra.mxu0 0.0
        %322 = vmatprep.subr.mxu0 0.0
        %323 = vmatpush1.msra.mxu0 0.0
        %324 = vmatprep.subr.mxu0 0.0
        %325 = vmatpush1.msra.mxu0 0.0
        %326 = vmatprep.subr.mxu0 0.0
        %327 = vmatpush1.msra.mxu0 0.0
        %328 = vmatprep.subr.mxu0 0.0
        %329 = vmatpush1.msra.mxu0 0.0
        %330 = vmatprep.subr.mxu0 0.0
        %331 = vmatpush1.msra.mxu0 0.0
        %332 = vmatprep.subr.mxu0 0.0
        %333 = vmatpush1.msra.mxu0 0.0
        %334 = vmatprep.subr.mxu0 0.0
        %335 = vmatpush1.msra.mxu0 0.0
        %336 = vmatprep.mubr.f32.mxu0 0.0
        %337 = vmatmul.mubr.f32.gmra.mrb[0].mxu0 %v270
        %v338 = vpop.f32.mrb[0].mxu0
        %v339 = vadd.f32 %v261, %v338
        %v340 = vpop.f32.mrb[0].mxu0
        %341 = vdwg.mxu0
        %v342 = vxor.u32 %v339, 2147483648
        %v343 = vmul.f32 %v342, 1.442695
        %v344 = vpow.pop %v343
        %v345 = vadd.f32 %v344, 1.0
        %v346 = vrcp.pop %v345
        %v347 = vmul.f32 1.0, %v346
        %v348 = vmul.f32 %v339, %v347
        %v349 = vld [vmem:[%s3] sm:$0xff]
        %v350 = vld [vmem:[%s4] sm:$0x1]
        %v352 = vsel %vm269, %v348, 0
        %354 = vmatprep.subr.mxu0 0.0
        %355 = vmatpush1.msra.mxu0 %v349
        %356 = vmatprep.subr.mxu0 0.0
        %357 = vmatpush1.msra.mxu0 0.0
        %358 = vmatprep.subr.mxu0 0.0
        %359 = vmatpush1.msra.mxu0 0.0
        %360 = vmatprep.subr.mxu0 0.0
        %361 = vmatpush1.msra.mxu0 0.0
        %362 = vmatprep.subr.mxu0 0.0
        %363 = vmatpush1.msra.mxu0 0.0
        %364 = vmatprep.subr.mxu0 0.0
        %365 = vmatpush1.msra.mxu0 0.0
        %366 = vmatprep.subr.mxu0 0.0
        %367 = vmatpush1.msra.mxu0 0.0
        %368 = vmatprep.subr.mxu0 0.0
        %369 = vmatpush1.msra.mxu0 0.0
        %370 = vmatprep.subr.mxu0 0.0
        %371 = vmatpush1.msra.mxu0 0.0
        %372 = vmatprep.subr.mxu0 0.0
        %373 = vmatpush1.msra.mxu0 0.0
        %374 = vmatprep.subr.mxu0 0.0
        %375 = vmatpush1.msra.mxu0 0.0
        %376 = vmatprep.subr.mxu0 0.0
        %377 = vmatpush1.msra.mxu0 0.0
        %378 = vmatprep.subr.mxu0 0.0
        %379 = vmatpush1.msra.mxu0 0.0
        %380 = vmatprep.subr.mxu0 0.0
        %381 = vmatpush1.msra.mxu0 0.0
        %382 = vmatprep.subr.mxu0 0.0
        %383 = vmatpush1.msra.mxu0 0.0
        %384 = vmatprep.subr.mxu0 0.0
        %385 = vmatpush1.msra.mxu0 0.0
        %386 = vmatprep.subr.mxu0 0.0
        %387 = vmatpush1.msra.mxu0 0.0
        %388 = vmatprep.subr.mxu0 0.0
        %389 = vmatpush1.msra.mxu0 0.0
        %390 = vmatprep.subr.mxu0 0.0
        %391 = vmatpush1.msra.mxu0 0.0
        %392 = vmatprep.subr.mxu0 0.0
        %393 = vmatpush1.msra.mxu0 0.0
        %394 = vmatprep.subr.mxu0 0.0
        %395 = vmatpush1.msra.mxu0 0.0
        %396 = vmatprep.subr.mxu0 0.0
        %397 = vmatpush1.msra.mxu0 0.0
        %398 = vmatprep.subr.mxu0 0.0
        %399 = vmatpush1.msra.mxu0 0.0
        %400 = vmatprep.subr.mxu0 0.0
        %401 = vmatpush1.msra.mxu0 0.0
        %402 = vmatprep.subr.mxu0 0.0
        %403 = vmatpush1.msra.mxu0 0.0
        %404 = vmatprep.subr.mxu0 0.0
        %405 = vmatpush1.msra.mxu0 0.0
        %406 = vmatprep.subr.mxu0 0.0
        %407 = vmatpush1.msra.mxu0 0.0
        %408 = vmatprep.subr.mxu0 0.0
        %409 = vmatpush1.msra.mxu0 0.0
        %410 = vmatprep.subr.mxu0 0.0
        %411 = vmatpush1.msra.mxu0 0.0
        %412 = vmatprep.subr.mxu0 0.0
        %413 = vmatpush1.msra.mxu0 0.0
        %414 = vmatprep.subr.mxu0 0.0
        %415 = vmatpush1.msra.mxu0 0.0
        %416 = vmatprep.subr.mxu0 0.0
        %417 = vmatpush1.msra.mxu0 0.0
        %418 = vmatprep.mubr.f32.mxu0 0.0
        %419 = vmatmul.mubr.f32.gmra.mrb[0].mxu0 %v352
        %v420 = vpop.f32.mrb[0].mxu0
        %v421 = vadd.f32 %v350, %v420
        %v422 = vpop.f32.mrb[0].mxu0
        %423 = vdwg.mxu0
        %v424 = vxor.u32 %v421, 2147483648
        %v425 = vmul.f32 %v424, 1.442695
        %v426 = vpow.pop %v425
        %v427 = vadd.f32 %v426, 1.0
        %v428 = vrcp.pop %v427
        %v429 = vmul.f32 1.0, %v428
        %v430 = vlaneseq
        %v431 = vshrl.u32 %v430, 7
        %v432 = vsub.s32 0, %v431
        %v433 = vrot.slane %v429, %v432
        %435 = vbcast.lane.b32.xlu0 %v433, 256
        %v436 = vpop.permute.xlu0 %435
        %v437 = vmul.f32 %v254, %v436
        %v438 = vmul.f32 %v255, %v436
        %439 = vst [vmem:[%s253] sm:$0xff] %v437
        %440 = vst [vmem:[%s253 + $0x8] sm:$0xff] %v438
        %s441 = sand.u32 %s141, 1
        %s442 = scalar_lea.sflag [#allocation4], %s441
        %s443 = sand.u32 %s141, 1
        %s444 = smul.addr %s443, 16
        %s445 = scalar_lea.vmem [#allocation7], %s444
        // Predicated region
        $region49: #{tpu_custom_call.1} parent=39 // pred_check
          %p446 = pneg %p151
        $region50: #{tpu_custom_call.1} parent=39 // pred_check_branch
          %448 = sbr.rel (%p446) target = $region52
        $region51: #{tpu_custom_call.1} parent=39 // pred_region
          %s450 = ssub.s32 256, 256
          %451 = vsyncadd %s442, %s450
          %s452 = smul.addr %s23, 2
          %s453 = smul.addr %s452, 128
          %s454 = scalar_lea.hbm %s5, %s453
          %s456 = sshll.u32 %s445, 4
          %s457 = int_to_ptr.vmem [resolvable:$true] %s456
          %459 = dma.vmem_to_hbm [thread:$0]  %s457, 256, %s454, %s442
        $region52: #{tpu_custom_call.1} parent=39 // pred_fallthru
          _
      $region40: #{tpu_custom_call.1} parent=5 // pred_fallthru
        _
      %p460 = scmp.le.s32.totalorder 2, %s18
      // Predicated region
      $region53: #{tpu_custom_call.1} parent=5 // pred_check
        %p461 = pneg %p460
      $region54: #{tpu_custom_call.1} parent=5 // pred_check_branch
        %463 = sbr.rel (%p461) target = $region56
      $region55: #{tpu_custom_call.1} parent=5 // pred_region
        %s464 = ssub.s32 %s18, 2
        // Predicated region
        $region57: #{tpu_custom_call.1} parent=55 // pred_check
          %p465 = pneg %p157
        $region58: #{tpu_custom_call.1} parent=55 // pred_check_branch
          %467 = sbr.rel (%p465) target = $region60
        $region59: #{tpu_custom_call.1} parent=55 // pred_region
          %s468 = sand.u32 %s142, 1
          %s469 = scalar_lea.sflag [#allocation4], %s468
          %s470 = sand.u32 %s142, 1
          %s471 = smul.addr %s470, 16
          %s472 = scalar_lea.vmem [#allocation7], %s471
          %473 = dma.done %s469, 256
        $region60: #{tpu_custom_call.1} parent=55 // pred_fallthru
          _
      $region56: #{tpu_custom_call.1} parent=5 // pred_fallthru
        _
    $region6: #{tpu_custom_call.1} parent=1 // loop_footer
      %s22 = sadd.s32 1, %s18
    $region7: #{tpu_custom_call.1} parent=1 // loop_footer_branch
      %17 = sbr.rel target = $region3
    $region8: #{tpu_custom_call.1} parent=1 // loop_exit
      _
    %474 = vsyncpa [#allocation3], 1
    %s475 = scalar_lea.sflag [#allocation3], 1
    %476 = vsyncpa %s475, 1
    %477 = vsyncpa [#allocation6], 1
    %478 = vsyncpa [#allocation4], 1
    %s479 = scalar_lea.sflag [#allocation4], 1
    %480 = vsyncpa %s479, 1

</llo_original>
